<compile_context>
chip_gen: v5e
topology: v5e:2x2
jax: 0.10.0
libtpu: 0.0.40
codegen_flags: <defaults>
</compile_context>

<pallas_src>
import functools
import numpy as np
import jax
import jax.numpy as jnp
from jax import lax
from jax.experimental import pallas as pl
from jax.experimental.pallas import tpu as pltpu

_SUB = 8               # sublane multiple for channel chunks
_UNROLL_MAX = 16       # statically unroll the distinct-delay loop up to this many steps


def _delay_kernel(d_ref, x_ref, o_ref, *, s_max, unrolled):
    """out[n, c, t] = x[n, c, t - d[c]] for t >= d[c], else 0.

    d_ref : VMEM int32 [1, cc, 1]   per-channel integer delay steps (0 <= d <= s_max)
    x_ref : VMEM [N, cc, T]         input chunk (native layout)
    o_ref : VMEM [N, cc, T]         output chunk
    """
    n, cc, t = x_ref.shape
    x = x_ref[...]
    d = d_ref[...]                                   # (1, cc, 1): broadcasts over batch & time

    # s = 0 pass (no shift, prefix mask trivially true).
    out = jnp.where(d == 0, x, jnp.zeros_like(x))

    if s_max > 0:
        if unrolled:
            # small static delay range: independent rolls, full-tile VPU selects
            for s in range(1, s_max + 1):
                out = jnp.where(d == s, pltpu.roll(x, s, axis=2), out)
        else:
            # large / unbounded delay range: incremental roll-by-1 (static shift),
            # loop counter only feeds the compare
            def body(s, carry):
                cur, acc = carry
                cur = pltpu.roll(cur, 1, axis=2)
                acc = jnp.where(d == s, cur, acc)
                return cur, acc
            _, out = lax.fori_loop(1, s_max + 1, body, (x, out))

        # roll wraps the tail around; zero the invalid prefix (t < d) in one pass
        tidx = lax.broadcasted_iota(jnp.int32, (n, cc, t), 2)
        out = jnp.where(tidx >= d, out, jnp.zeros_like(out))

    o_ref[...] = out


def _vmem_capacity_bytes():
    """Generation-aware VMEM capacity (fallback: assume v7x-sized 64 MiB)."""
    try:
        cap = getattr(pltpu.get_tpu_info(), "vmem_capacity_bytes", None)
        if cap:
            return int(cap)
    except Exception:
        pass
    return 64 * 1024 * 1024


def _pick_chunk(cs, n, t, itemsize, vmem_cap):
    """Channels per grid step, sized from the VMEM budget."""
    # per-channel VMEM footprint estimate:
    #   double-buffered input + output blocks : 4 * n * t * itemsize
    #   in-kernel working set (x, cur, out,
    #   iota/mask; roughly f32-sized values)  : ~4 * n * t * 4
    per_ch = 4 * n * t * itemsize + 4 * n * t * 4
    budget = int(vmem_cap * 0.40)
    cc = max(_SUB, budget // max(per_ch, 1))
    if cc >= cs:
        # Whole channel axis fits in one block.  If the tensor is big enough that
        # per-step overhead (~0.35 us) is negligible, split into two chunks anyway so
        # the "parallel" grid axis gives both of v7x's TensorCores work.
        if cs >= 4 * _SUB and cs * per_ch > (8 << 20):
            half = -(-((cs + 1) // 2) // _SUB) * _SUB
            return min(half, cs)
        return cs
    cc = min(cc, cs)
    return max(_SUB, (cc // _SUB) * _SUB)


def delay_forward(x, delay, *, sampling_time=1, max_delay=None):
    """Pallas equivalent of slayer Delay.forward (inference path).

    x     : [N, C, *spatial, T] tensor
    delay : [C] float learnable per-channel delay
    """
    orig_shape = x.shape
    n, c, t = x.shape[0], x.shape[1], x.shape[-1]
    spatial = int(np.prod(x.shape[2:-1])) if x.ndim > 3 else 1
    cs = c * spatial

    # static bound on integer delay steps (delay is clamped to [0, max_delay])
    if max_delay is None:
        s_max = t
    else:
        s_max = min(int(np.round(max_delay / float(sampling_time))), t)

    # Delay.clamp(): clamp delay to allowable range.
    hi = jnp.inf if max_delay is None else float(max_delay)
    d = jnp.clip(delay.astype(jnp.float32), 0.0, hi)
    # shift(): integer number of sampling steps (round-half-to-even, like torch.round).
    d_steps = jnp.round(d / float(sampling_time)).astype(jnp.int32)
    d_steps = jnp.clip(d_steps, 0, s_max)          # delay >= T -> all-zero output channel
    # broadcast per-channel delay over spatial dims (module's reshape(-1,1,1).repeat path)
    d_steps = jnp.repeat(d_steps, spatial)         # [cs], channel-major

    itemsize = jnp.dtype(x.dtype).itemsize
    vmem_cap = _vmem_capacity_bytes()
    cc = _pick_chunk(cs, n, t, itemsize, vmem_cap)
    num_chunks = -(-cs // cc)
    pad_ch = num_chunks * cc - cs
    if pad_ch:
        # trailing partial block: padded channels get delay 0; whatever Pallas reads past
        # the end of x for them is selected untouched and their output writes are dropped
        d_steps = jnp.concatenate([d_steps, jnp.zeros((pad_ch,), jnp.int32)])
    d_blocks = d_steps.reshape(num_chunks, cc, 1)

    x_flat = x.reshape(n, cs, t)                   # contiguous-dim merge: no data movement

    kernel = functools.partial(_delay_kernel, s_max=s_max,
                               unrolled=(s_max <= _UNROLL_MAX))

    out = pl.pallas_call(
        kernel,
        out_shape=jax.ShapeDtypeStruct((n, cs, t), x.dtype),
        grid=(num_chunks,),
        in_specs=[
            pl.BlockSpec((1, cc, 1), lambda i: (i, 0, 0)),     # per-channel delay steps
            pl.BlockSpec((n, cc, t), lambda i: (0, i, 0)),     # input chunk
        ],
        out_specs=pl.BlockSpec((n, cc, t), lambda i: (0, i, 0)),
        compiler_params=pltpu.CompilerParams(
            dimension_semantics=("parallel",),                 # channel chunks independent
            vmem_limit_bytes=int(vmem_cap * 0.75),             # ~48 MiB v7x / ~96 MiB v5e+v6e
        ),
    )(d_blocks, x_flat)

    return out.reshape(orig_shape)


def delay_reference(x, delay, *, sampling_time=1, max_delay=None):
    """Pure numpy reference of the same semantics (for verification)."""
    x = np.asarray(x)
    delay = np.asarray(delay, dtype=np.float64)
    n, c, t = x.shape[0], x.shape[1], x.shape[-1]
    hi = np.inf if max_delay is None else max_delay
    d = np.clip(delay, 0.0, hi)
    d_steps = np.clip(np.round(d / sampling_time).astype(np.int64), 0, t)
    out = np.zeros_like(x)
    x4 = x.reshape(n, c, -1, t)
    o4 = out.reshape(n, c, -1, t)   # view into `out`
    for ch in range(c):
        s = int(d_steps[ch])
        if s < t:
            o4[:, ch, :, s:] = x4[:, ch, :, : t - s]
    return out


# TODO(synk): backward pass (shifted grad + finite-difference surrogate delay grad)
# of _delayFunction is not implemented; only the forward is kernelized.

if __name__ == "__main__":
    key = jax.random.PRNGKey(0)
    k1, k2, k3, k4, k5 = jax.random.split(key, 5)

    N, C, T = 2, 4, 16
    sampling_time = 1
    max_delay = 8

    # Deterministic stand-in for the module's lazy init (delay = rand(C)); scaled so the
    # clamp-to-[0, max_delay] path and nontrivial shifts are exercised.
    delay = jax.random.uniform(k1, (C,), jnp.float32) * (max_delay + 2.0)

    # Case 1: [Batch, Channel, Time]  -- statically-unrolled distinct-delay path.
    x = jax.random.normal(k2, (N, C, T), jnp.float32)
    y = jax.block_until_ready(
        delay_forward(x, delay, sampling_time=sampling_time, max_delay=max_delay))
    y_ref = delay_reference(x, delay, sampling_time=sampling_time, max_delay=max_delay)
    np.testing.assert_allclose(np.asarray(y), y_ref, rtol=0, atol=0)

    # Case 2: broadcast path [Batch, Channel, Spatial, Time].
    x2 = jax.random.normal(k3, (N, C, 16, T), jnp.float32)
    y2 = jax.block_until_ready(
        delay_forward(x2, delay, sampling_time=sampling_time, max_delay=max_delay))
    y2_ref = delay_reference(x2, delay, sampling_time=sampling_time, max_delay=max_delay)
    np.testing.assert_allclose(np.asarray(y2), y2_ref, rtol=0, atol=0)

    # Case 3: max_delay=None with delays spanning (and exceeding) T -- fori_loop path.
    C3, T3 = 8, 32
    delay3 = jax.random.uniform(k4, (C3,), jnp.float32) * (T3 + 4.0)
    x3 = jax.random.normal(k5, (N, C3, T3), jnp.float32)
    y3 = jax.block_until_ready(delay_forward(x3, delay3, sampling_time=1, max_delay=None))
    y3_ref = delay_reference(x3, delay3, sampling_time=1, max_delay=None)
    np.testing.assert_allclose(np.asarray(y3), y3_ref, rtol=0, atol=0)

    print("KERNEL_OK")
</pallas_src>

<mosaic_0001>
module attributes {stable_mosaic.version = 11 : i64} {
  func.func @_delay_kernel(%arg0: i32, %arg1: memref<1x4x1xi32, #tpu.memory_space<vmem>>, %arg2: memref<2x4x16xf32, #tpu.memory_space<vmem>>, %arg3: memref<2x4x16xf32, #tpu.memory_space<vmem>>) attributes {dimension_semantics = [#tpu.dimension_semantics<parallel>], iteration_bounds = array<i64: 1>, scalar_prefetch = 0 : i64, scratch_operands = 0 : i64, tpu.core_type = #tpu.core_type<tc>, window_params = [{transform_indices = @transform_0, window_bounds = array<i64: 1, 4, 1>}, {transform_indices = @transform_1, window_bounds = array<i64: 2, 4, 16>}, {transform_indices = @transform_2, window_bounds = array<i64: 2, 4, 16>}]} {
    %c0 = arith.constant 0 : index
    %c0_0 = arith.constant 0 : index
    %c0_1 = arith.constant 0 : index
    %0 = vector.load %arg2[%c0, %c0_0, %c0_1] : memref<2x4x16xf32, #tpu.memory_space<vmem>>, vector<2x4x16xf32>
    %c0_2 = arith.constant 0 : index
    %c0_3 = arith.constant 0 : index
    %c0_4 = arith.constant 0 : index
    %1 = vector.load %arg1[%c0_2, %c0_3, %c0_4] : memref<1x4x1xi32, #tpu.memory_space<vmem>>, vector<1x4x1xi32>
    %c0_i32 = arith.constant 0 : i32
    %2 = vector.broadcast %c0_i32 : i32 to vector<1x4x1xi32>
    %3 = arith.cmpi eq, %1, %2 : vector<1x4x1xi32>
    %cst = arith.constant 0.000000e+00 : f32
    %4 = vector.broadcast %cst : f32 to vector<2x4x16xf32>
    %5 = vector.shape_cast %3 : vector<1x4x1xi1> to vector<1x4x1xi1>
    %6 = vector.broadcast %5 : vector<1x4x1xi1> to vector<2x4x16xi1>
    %7 = arith.select %6, %0, %4 : vector<2x4x16xi1>, vector<2x4x16xf32>
    %c1_i32 = arith.constant 1 : i32
    %8 = vector.broadcast %c1_i32 : i32 to vector<1x4x1xi32>
    %9 = arith.cmpi eq, %1, %8 : vector<1x4x1xi32>
    %c1_i32_5 = arith.constant 1 : i32
    %10 = tpu.dynamic_rotate %0 by %c1_i32_5 dim 2 : vector<2x4x16xf32>, i32 -> vector<2x4x16xf32>
    %11 = vector.shape_cast %9 : vector<1x4x1xi1> to vector<1x4x1xi1>
    %12 = vector.broadcast %11 : vector<1x4x1xi1> to vector<2x4x16xi1>
    %13 = arith.select %12, %10, %7 : vector<2x4x16xi1>, vector<2x4x16xf32>
    %c2_i32 = arith.constant 2 : i32
    %14 = vector.broadcast %c2_i32 : i32 to vector<1x4x1xi32>
    %15 = arith.cmpi eq, %1, %14 : vector<1x4x1xi32>
    %c2_i32_6 = arith.constant 2 : i32
    %16 = tpu.dynamic_rotate %0 by %c2_i32_6 dim 2 : vector<2x4x16xf32>, i32 -> vector<2x4x16xf32>
    %17 = vector.shape_cast %15 : vector<1x4x1xi1> to vector<1x4x1xi1>
    %18 = vector.broadcast %17 : vector<1x4x1xi1> to vector<2x4x16xi1>
    %19 = arith.select %18, %16, %13 : vector<2x4x16xi1>, vector<2x4x16xf32>
    %c3_i32 = arith.constant 3 : i32
    %20 = vector.broadcast %c3_i32 : i32 to vector<1x4x1xi32>
    %21 = arith.cmpi eq, %1, %20 : vector<1x4x1xi32>
    %c3_i32_7 = arith.constant 3 : i32
    %22 = tpu.dynamic_rotate %0 by %c3_i32_7 dim 2 : vector<2x4x16xf32>, i32 -> vector<2x4x16xf32>
    %23 = vector.shape_cast %21 : vector<1x4x1xi1> to vector<1x4x1xi1>
    %24 = vector.broadcast %23 : vector<1x4x1xi1> to vector<2x4x16xi1>
    %25 = arith.select %24, %22, %19 : vector<2x4x16xi1>, vector<2x4x16xf32>
    %c4_i32 = arith.constant 4 : i32
    %26 = vector.broadcast %c4_i32 : i32 to vector<1x4x1xi32>
    %27 = arith.cmpi eq, %1, %26 : vector<1x4x1xi32>
    %c4_i32_8 = arith.constant 4 : i32
    %28 = tpu.dynamic_rotate %0 by %c4_i32_8 dim 2 : vector<2x4x16xf32>, i32 -> vector<2x4x16xf32>
    %29 = vector.shape_cast %27 : vector<1x4x1xi1> to vector<1x4x1xi1>
    %30 = vector.broadcast %29 : vector<1x4x1xi1> to vector<2x4x16xi1>
    %31 = arith.select %30, %28, %25 : vector<2x4x16xi1>, vector<2x4x16xf32>
    %c5_i32 = arith.constant 5 : i32
    %32 = vector.broadcast %c5_i32 : i32 to vector<1x4x1xi32>
    %33 = arith.cmpi eq, %1, %32 : vector<1x4x1xi32>
    %c5_i32_9 = arith.constant 5 : i32
    %34 = tpu.dynamic_rotate %0 by %c5_i32_9 dim 2 : vector<2x4x16xf32>, i32 -> vector<2x4x16xf32>
    %35 = vector.shape_cast %33 : vector<1x4x1xi1> to vector<1x4x1xi1>
    %36 = vector.broadcast %35 : vector<1x4x1xi1> to vector<2x4x16xi1>
    %37 = arith.select %36, %34, %31 : vector<2x4x16xi1>, vector<2x4x16xf32>
    %c6_i32 = arith.constant 6 : i32
    %38 = vector.broadcast %c6_i32 : i32 to vector<1x4x1xi32>
    %39 = arith.cmpi eq, %1, %38 : vector<1x4x1xi32>
    %c6_i32_10 = arith.constant 6 : i32
    %40 = tpu.dynamic_rotate %0 by %c6_i32_10 dim 2 : vector<2x4x16xf32>, i32 -> vector<2x4x16xf32>
    %41 = vector.shape_cast %39 : vector<1x4x1xi1> to vector<1x4x1xi1>
    %42 = vector.broadcast %41 : vector<1x4x1xi1> to vector<2x4x16xi1>
    %43 = arith.select %42, %40, %37 : vector<2x4x16xi1>, vector<2x4x16xf32>
    %c7_i32 = arith.constant 7 : i32
    %44 = vector.broadcast %c7_i32 : i32 to vector<1x4x1xi32>
    %45 = arith.cmpi eq, %1, %44 : vector<1x4x1xi32>
    %c7_i32_11 = arith.constant 7 : i32
    %46 = tpu.dynamic_rotate %0 by %c7_i32_11 dim 2 : vector<2x4x16xf32>, i32 -> vector<2x4x16xf32>
    %47 = vector.shape_cast %45 : vector<1x4x1xi1> to vector<1x4x1xi1>
    %48 = vector.broadcast %47 : vector<1x4x1xi1> to vector<2x4x16xi1>
    %49 = arith.select %48, %46, %43 : vector<2x4x16xi1>, vector<2x4x16xf32>
    %c8_i32 = arith.constant 8 : i32
    %50 = vector.broadcast %c8_i32 : i32 to vector<1x4x1xi32>
    %51 = arith.cmpi eq, %1, %50 : vector<1x4x1xi32>
    %c8_i32_12 = arith.constant 8 : i32
    %52 = tpu.dynamic_rotate %0 by %c8_i32_12 dim 2 : vector<2x4x16xf32>, i32 -> vector<2x4x16xf32>
    %53 = vector.shape_cast %51 : vector<1x4x1xi1> to vector<1x4x1xi1>
    %54 = vector.broadcast %53 : vector<1x4x1xi1> to vector<2x4x16xi1>
    %55 = arith.select %54, %52, %49 : vector<2x4x16xi1>, vector<2x4x16xf32>
    %56 = tpu.iota {dimensions = array<i32: 2>} : vector<2x4x16xi32>
    %57 = vector.broadcast %1 : vector<1x4x1xi32> to vector<2x4x16xi32>
    %58 = arith.cmpi sge, %56, %57 : vector<2x4x16xi32>
    %cst_13 = arith.constant 0.000000e+00 : f32
    %59 = vector.broadcast %cst_13 : f32 to vector<2x4x16xf32>
    %60 = arith.select %58, %55, %59 : vector<2x4x16xi1>, vector<2x4x16xf32>
    %c0_14 = arith.constant 0 : index
    %c0_15 = arith.constant 0 : index
    %c0_16 = arith.constant 0 : index
    %61 = vector.load %arg3[%c0_14, %c0_15, %c0_16] : memref<2x4x16xf32, #tpu.memory_space<vmem>>, vector<2x4x16xf32>
    tpu.vector_store %arg3[%c0_14, %c0_15, %c0_16], %60 {strides = array<i32>} : memref<2x4x16xf32, #tpu.memory_space<vmem>>, vector<2x4x16xf32>,
    return
  }
  func.func @transform_0(%arg0: i32) -> (i32, i32, i32) {
    %c0_i32 = arith.constant 0 : i32
    %c0_i32_0 = arith.constant 0 : i32
    %c0_i32_1 = arith.constant 0 : i32
    return %arg0, %c0_i32, %c0_i32_0 : i32, i32, i32
  }
  func.func @transform_1(%arg0: i32) -> (i32, i32, i32) {
    %c0_i32 = arith.constant 0 : i32
    %c0_i32_0 = arith.constant 0 : i32
    %c0_i32_1 = arith.constant 0 : i32
    return %c0_i32, %arg0, %c0_i32_0 : i32, i32, i32
  }
  func.func @transform_2(%arg0: i32) -> (i32, i32, i32) {
    %c0_i32 = arith.constant 0 : i32
    %c0_i32_0 = arith.constant 0 : i32
    %c0_i32_1 = arith.constant 0 : i32
    return %c0_i32, %arg0, %c0_i32_0 : i32, i32, i32
  }
}

</mosaic_0001>

<llo_original>
// kernel: tpu_custom_call.1
$region0: #{tpu_custom_call.1}
  #allocation0 [shape = 'u32[]', space=smem, size = 0x4, offset = 0x4, fixed_abs, tag = 'smem constant byte address 0x4 - core index']
  #allocation1 [shape = 'u32[72,128]{1,0:T(1,128)}', space=vmem, size = 0x9000, scoped, tag = 'internal scratch']
  %s0 = inlined_call_operand.vmem [shape: s32[1,4,1], index: 0, kind: input, shape index: {}]
  %s1 = inlined_call_operand.hbm [shape: f32[2,4,16], index: 1, kind: input, shape index: {}]
  %s2 = inlined_call_operand.hbm [shape: f32[2,4,16], index: 2, kind: output, shape index: {}]
  %s3 = sld [smem:[#allocation0]]
  $region22: #{tpu_custom_call.1} parent=0
    _
  %s5 = ssub.s32 1, %s3
  %s6 = scalar_select 0, %s5, %s3
  $region1: #{tpu_custom_call.1} parent=0
    #allocation2 [shape = 'u8[4096]{0}', space=vmem, size = 0x1000, scoped, tag = 'input window, operand 1, single buffered']
    #allocation3 [shape = 's32[1]{0}', space=sflag, size = 0x4, scoped, tag = 'scoped memory for tpu_custom_call.1']
    #allocation4 [shape = 's32[1]{0}', space=sflag, size = 0x4, scoped, tag = 'scoped memory for tpu_custom_call.1']
    #allocation5 [shape = 'u8[4096]{0}', space=vmem, size = 0x1000, scoped, tag = 'output window, operand 0, single buffered']
    %7 = vsyncpa [#allocation3], 0
    %8 = vsyncpa [#allocation4], 0
    // Predicated region
    $region2: #{tpu_custom_call.1} parent=1 // pred_check
      _
    $region3: #{tpu_custom_call.1} parent=1 // pred_check_branch
      %10 = sbr.rel (0) target = $region5
    $region4: #{tpu_custom_call.1} parent=1 // pred_region
      _
    $region5: #{tpu_custom_call.1} parent=1 // pred_fallthru
      _
    // Predicated region
    $region6: #{tpu_custom_call.1} parent=1 // pred_check
      _
    $region7: #{tpu_custom_call.1} parent=1 // pred_check_branch
      %12 = sbr.rel (0) target = $region9
    $region8: #{tpu_custom_call.1} parent=1 // pred_region
      %14 = vsyncadd [#allocation3], 0
      %s15 = sshll.u32 %s1, 4
      %s16 = int_to_ptr.hbm [resolvable:$true] %s15
      %s17 = sshll.u32 [#allocation2], 4
      %s18 = int_to_ptr.vmem [resolvable:$true] %s17
      %23 = dma.hbm_to_vmem [thread:$0]  %s16, 128, %s18, [#allocation3], 64, 64, 4
    $region9: #{tpu_custom_call.1} parent=1 // pred_fallthru
      _
    // Predicated region
    $region10: #{tpu_custom_call.1} parent=1 // pred_check
      _
    $region11: #{tpu_custom_call.1} parent=1 // pred_check_branch
      %25 = sbr.rel (0) target = $region13
    $region12: #{tpu_custom_call.1} parent=1 // pred_region
      %27 = dma.done [#allocation3], 128
    $region13: #{tpu_custom_call.1} parent=1 // pred_fallthru
      _
    %v28 = vld [vmem:[#allocation2] sm:$0xf]
    %v29 = vld [vmem:[#allocation2 + $0x4] sm:$0xf]
    %v30 = vld [vmem:[%s0] sm:$0xf]
    %vm31 = vcmp.eq.s32.totalorder %v30, 0
    %v32 = vsel %vm31, 1, 0
    %33 = vset.pattern.permute.xlu0 0
    %34 = vperm.xlu0 %33, %v32
    %v35 = vpop.permute.xlu0 %34
    %vm36 = vcmp.eq.s32.totalorder %v35, 1
    %v37 = vsel %vm36, %v28, 0.0
    %v38 = vsel %vm36, %v29, 0.0
    %vm39 = vcmp.eq.s32.totalorder %v30, 1
    %vm40 = vcmask 1047680
    %41 = vrot.lane.b32.xlu0 %v28, 16
    %v42 = vpop.permute.xlu0 %41
    %v43 = vsel %vm40, %v42, %v28
    %44 = vrot.lane.b32.xlu0 %v29, 16
    %v45 = vpop.permute.xlu0 %44
    %v46 = vsel %vm40, %v45, %v29
    %47 = vrot.lane.b32.xlu0 %v43, 16
    %v48 = vpop.permute.xlu0 %47
    %49 = vrot.lane.b32.xlu0 %v46, 16
    %v50 = vpop.permute.xlu0 %49
    %v51 = vsel %vm40, %v48, %v28
    %v52 = vsel %vm40, %v50, %v29
    %v53 = vsel %vm39, 1, 0
    %54 = vset.pattern.permute.xlu0 0
    %55 = vperm.xlu0 %54, %v53
    %v56 = vpop.permute.xlu0 %55
    %vm57 = vcmp.eq.s32.totalorder %v56, 1
    %60 = vrot.lane.b32.xlu0 %v37, 15
    %v61 = vpop.permute.xlu0 %60
    %62 = vrot.lane.b32.xlu0 %v38, 15
    %v63 = vpop.permute.xlu0 %62
    %v66 = vsel %vm57, %v51, %v61
    %v67 = vsel %vm57, %v52, %v63
    %vm68 = vcmp.eq.s32.totalorder %v30, 2
    %v69 = vsel %vm68, 1, 0
    %70 = vset.pattern.permute.xlu0 0
    %71 = vperm.xlu0 %70, %v69
    %v72 = vpop.permute.xlu0 %71
    %vm73 = vcmp.eq.s32.totalorder %v72, 1
    %76 = vrot.lane.b32.xlu0 %v66, 127
    %v77 = vpop.permute.xlu0 %76
    %78 = vrot.lane.b32.xlu0 %v67, 127
    %v79 = vpop.permute.xlu0 %78
    %v82 = vsel %vm73, %v51, %v77
    %v83 = vsel %vm73, %v52, %v79
    %vm84 = vcmp.eq.s32.totalorder %v30, 3
    %v85 = vsel %vm84, 1, 0
    %86 = vset.pattern.permute.xlu0 0
    %87 = vperm.xlu0 %86, %v85
    %v88 = vpop.permute.xlu0 %87
    %vm89 = vcmp.eq.s32.totalorder %v88, 1
    %92 = vrot.lane.b32.xlu0 %v82, 127
    %v93 = vpop.permute.xlu0 %92
    %94 = vrot.lane.b32.xlu0 %v83, 127
    %v95 = vpop.permute.xlu0 %94
    %v98 = vsel %vm89, %v51, %v93
    %v99 = vsel %vm89, %v52, %v95
    %vm100 = vcmp.eq.s32.totalorder %v30, 4
    %v101 = vsel %vm100, 1, 0
    %102 = vset.pattern.permute.xlu0 0
    %103 = vperm.xlu0 %102, %v101
    %v104 = vpop.permute.xlu0 %103
    %vm105 = vcmp.eq.s32.totalorder %v104, 1
    %108 = vrot.lane.b32.xlu0 %v98, 127
    %v109 = vpop.permute.xlu0 %108
    %110 = vrot.lane.b32.xlu0 %v99, 127
    %v111 = vpop.permute.xlu0 %110
    %v114 = vsel %vm105, %v51, %v109
    %v115 = vsel %vm105, %v52, %v111
    %vm116 = vcmp.eq.s32.totalorder %v30, 5
    %v117 = vsel %vm116, 1, 0
    %118 = vset.pattern.permute.xlu0 0
    %119 = vperm.xlu0 %118, %v117
    %v120 = vpop.permute.xlu0 %119
    %vm121 = vcmp.eq.s32.totalorder %v120, 1
    %124 = vrot.lane.b32.xlu0 %v114, 127
    %v125 = vpop.permute.xlu0 %124
    %126 = vrot.lane.b32.xlu0 %v115, 127
    %v127 = vpop.permute.xlu0 %126
    %v130 = vsel %vm121, %v51, %v125
    %v131 = vsel %vm121, %v52, %v127
    %vm132 = vcmp.eq.s32.totalorder %v30, 6
    %v133 = vsel %vm132, 1, 0
    %134 = vset.pattern.permute.xlu0 0
    %135 = vperm.xlu0 %134, %v133
    %v136 = vpop.permute.xlu0 %135
    %vm137 = vcmp.eq.s32.totalorder %v136, 1
    %140 = vrot.lane.b32.xlu0 %v130, 127
    %v141 = vpop.permute.xlu0 %140
    %142 = vrot.lane.b32.xlu0 %v131, 127
    %v143 = vpop.permute.xlu0 %142
    %v146 = vsel %vm137, %v51, %v141
    %v147 = vsel %vm137, %v52, %v143
    %vm148 = vcmp.eq.s32.totalorder %v30, 7
    %v149 = vsel %vm148, 1, 0
    %150 = vset.pattern.permute.xlu0 0
    %151 = vperm.xlu0 %150, %v149
    %v152 = vpop.permute.xlu0 %151
    %vm153 = vcmp.eq.s32.totalorder %v152, 1
    %156 = vrot.lane.b32.xlu0 %v146, 127
    %v157 = vpop.permute.xlu0 %156
    %158 = vrot.lane.b32.xlu0 %v147, 127
    %v159 = vpop.permute.xlu0 %158
    %v162 = vsel %vm153, %v51, %v157
    %v163 = vsel %vm153, %v52, %v159
    %vm164 = vcmp.eq.s32.totalorder %v30, 8
    %v165 = vsel %vm164, 1, 0
    %166 = vset.pattern.permute.xlu0 0
    %167 = vperm.xlu0 %166, %v165
    %v168 = vpop.permute.xlu0 %167
    %vm169 = vcmp.eq.s32.totalorder %v168, 1
    %172 = vrot.lane.b32.xlu0 %v162, 127
    %v173 = vpop.permute.xlu0 %172
    %174 = vrot.lane.b32.xlu0 %v163, 127
    %v175 = vpop.permute.xlu0 %174
    %v178 = vsel %vm169, %v51, %v173
    %v179 = vsel %vm169, %v52, %v175
    %v180 = vlaneseq
    %v181 = vand.u32 %v180, 127
    %182 = vset.pattern.permute.xlu0 0
    %183 = vperm.xlu0 %182, %v30
    %v184 = vpop.permute.xlu0 %183
    %vm185 = vcmp.ge.s32.totalorder %v181, %v184
    %188 = vrot.lane.b32.xlu0 %v178, 120
    %v189 = vpop.permute.xlu0 %188
    %190 = vrot.lane.b32.xlu0 %v179, 120
    %v191 = vpop.permute.xlu0 %190
    %v194 = vsel %vm185, %v189, 0.0
    %v195 = vsel %vm185, %v191, 0.0
    %vm196 = vcmask 125952
    %197 = vst.msk [vmem:[#allocation5] sm:$0xf] %vm196, %v194
    %198 = vst.msk [vmem:[#allocation5 + $0x4] sm:$0xf] %vm196, %v195
    // Predicated region
    $region14: #{tpu_custom_call.1} parent=1 // pred_check
      _
    $region15: #{tpu_custom_call.1} parent=1 // pred_check_branch
      %200 = sbr.rel (0) target = $region17
    $region16: #{tpu_custom_call.1} parent=1 // pred_region
      %202 = vsyncadd [#allocation4], 0
      %s203 = sshll.u32 [#allocation5], 4
      %s204 = int_to_ptr.vmem [resolvable:$true] %s203
      %s205 = sshll.u32 %s2, 4
      %s206 = int_to_ptr.hbm [resolvable:$true] %s205
      %211 = dma.vmem_to_hbm [thread:$0]  %s204, 128, %s206, [#allocation4], 64, 64, 4
    $region17: #{tpu_custom_call.1} parent=1 // pred_fallthru
      _
    // Predicated region
    $region18: #{tpu_custom_call.1} parent=1 // pred_check
      _
    $region19: #{tpu_custom_call.1} parent=1 // pred_check_branch
      %213 = sbr.rel (0) target = $region21
    $region20: #{tpu_custom_call.1} parent=1 // pred_region
      %215 = dma.done [#allocation4], 128
    $region21: #{tpu_custom_call.1} parent=1 // pred_fallthru
      _
    %216 = vsyncpa [#allocation3], 1
    %217 = vsyncpa [#allocation4], 1

</llo_original>
